<compile_context>
chip_gen: v6e
topology: v6e:2x2x1
jax: 0.10.0
libtpu: 0.0.40
codegen_flags: <defaults>
</compile_context>

<pallas_src>
import functools

import jax
import jax.numpy as jnp
from jax.experimental import pallas as pl
from jax.experimental.pallas import tpu as pltpu


def _fused_linear_kernel(x_ref, w_ref, b_ref, o_ref):
    # x: [TM, in]   w: [in, out]   b: [1, out]   o: [TM, out]
    x = x_ref[...]
    w = w_ref[...]
    b = b_ref[...]
    # Single MXU matmul (pre-fused, pre-transposed weights) + VPU bias add.
    y = jnp.dot(x, w, preferred_element_type=jnp.float32) + b
    o_ref[...] = y.astype(o_ref.dtype)


def fuse_params(w1, b1, w2):
    """Fold the two bias-free-compatible linears into one affine map.

    w1: [hidden, in] (PyTorch layout), b1: [hidden], w2: [out, hidden]
    returns (w_fused [in, out], b_fused [1, out]).
    Exact because SimpleTestModel.forward applies NO nonlinearity between
    linear1 and linear2.
    """
    w_fused = jnp.dot(w1.T, w2.T)                 # [in, out] = [10, 3]
    b_fused = jnp.dot(b1, w2.T).reshape(1, -1)    # [1, out]  (2-D for TPU)
    return w_fused, b_fused


def _round_up(x, m):
    return ((x + m - 1) // m) * m


def _choose_tm(batch, tm_max):
    """Pick the batch tile size.

    Small B -> one full-extent tile (step overhead would dominate a split).
    Larger B -> at least two tiles (keeps both v7x TensorCores busy), each a
    multiple of 8 rows, capped at tm_max.
    """
    if batch <= 1024:
        return batch
    half = _round_up(pl.cdiv(batch, 2), 8)
    return min(tm_max, half)


def fused_linear_pallas(x, w_fused, b_fused, *, tm_max=8192):
    """Pallas TPU kernel for  y = x @ w_fused + b_fused."""
    batch, in_features = x.shape
    out_features = w_fused.shape[1]

    tm = _choose_tm(batch, tm_max)
    grid = (pl.cdiv(batch, tm),)

    # Advisory cost for XLA's scheduler (logical traffic; trivial FLOPs).
    cost = pl.CostEstimate(
        flops=2 * batch * in_features * out_features + batch * out_features,
        transcendentals=0,
        bytes_accessed=4 * (batch * in_features
                            + in_features * out_features
                            + out_features
                            + batch * out_features),
    )

    return pl.pallas_call(
        _fused_linear_kernel,
        out_shape=jax.ShapeDtypeStruct((batch, out_features), x.dtype),
        grid=grid,
        in_specs=[
            pl.BlockSpec((tm, in_features), lambda i: (i, 0)),
            pl.BlockSpec((in_features, out_features), lambda i: (0, 0)),
            pl.BlockSpec((1, out_features), lambda i: (0, 0)),
        ],
        out_specs=pl.BlockSpec((tm, out_features), lambda i: (i, 0)),
        compiler_params=pltpu.CompilerParams(
            # Batch tiles are independent -> "parallel" lets v7x's two
            # TensorCores split the grid (no effect on single-TC v5e/v6e).
            dimension_semantics=("parallel",),
            # Peak VMEM at tm_max=8192 is ~16-17 MiB (double-buffered,
            # lane-padded); 32 MiB covers v5e's 16 MiB default scoped limit
            # and stays well inside every generation's physical VMEM.
            vmem_limit_bytes=32 * 1024 * 1024,
        ),
        cost_estimate=cost,
    )(x, w_fused, b_fused)


@functools.partial(jax.jit, static_argnames=("tm_max", "use_pallas"))
def simple_test_model_forward(x, w1, b1, w2, *, tm_max=8192, use_pallas=True):
    """Pallas TPU implementation of SimpleTestModel.forward.

    x : [B, 10] (f32)
    w1: [5, 10] (PyTorch nn.Linear layout: [out, in]), b1: [5], w2: [3, 5]
    returns [B, 3]

    use_pallas:
      True  -> always run the Pallas kernel.
      False -> plain fused XLA dot (cheapest for tiny B, launch-overhead
               dominated problems).
    """
    # Fusion stays inside this jit, so it is compiled/cached with the call
    # (hoist further by calling fuse_params() once at parameter-load time and
    # using fused_linear_pallas directly).
    w_fused, b_fused = fuse_params(w1, b1, w2)
    if not use_pallas:
        return jnp.dot(x, w_fused) + b_fused
    return fused_linear_pallas(x, w_fused, b_fused, tm_max=tm_max)


def reference_forward(x, w1, b1, w2):
    """Pure-JAX reference matching PyTorch semantics (two separate linears)."""
    h = x @ w1.T + b1
    return h @ w2.T


if __name__ == "__main__":
    key = jax.random.PRNGKey(0)
    k_x, k_w1, k_b1, k_w2 = jax.random.split(key, 4)

    batch = 8
    in_features, hidden, out_features = 10, 5, 3

    # Deterministic synthetic parameters. PyTorch stores Linear weight as
    # [out, in]; we mirror that layout here and adapt inside the wrapper.
    x = jax.random.normal(k_x, (batch, in_features), dtype=jnp.float32)
    w1 = jax.random.normal(k_w1, (hidden, in_features), dtype=jnp.float32) * 0.1
    b1 = jax.random.normal(k_b1, (hidden,), dtype=jnp.float32) * 0.1
    w2 = jax.random.normal(k_w2, (out_features, hidden), dtype=jnp.float32) * 0.1

    # Force the Pallas path so the kernel itself is exercised.
    out = simple_test_model_forward(x, w1, b1, w2, use_pallas=True)
    out = jax.block_until_ready(out)

    ref = reference_forward(x, w1, b1, w2)
    assert out.shape == (batch, out_features), out.shape
    assert jnp.allclose(out, ref, atol=1e-4, rtol=1e-4), "pallas mismatch vs reference"

    # Also sanity-check the small-B XLA fast path against the same reference.
    out_xla = jax.block_until_ready(
        simple_test_model_forward(x, w1, b1, w2, use_pallas=False))
    assert jnp.allclose(out_xla, ref, atol=1e-4, rtol=1e-4), "fast path mismatch"

    print("KERNEL_OK")
</pallas_src>

<mosaic_0001>
module attributes {stable_mosaic.version = 11 : i64} {
  func.func @_fused_linear_kernel(%arg0: i32, %arg1: memref<8x10xf32, #tpu.memory_space<vmem>>, %arg2: memref<10x3xf32, #tpu.memory_space<vmem>>, %arg3: memref<1x3xf32, #tpu.memory_space<vmem>>, %arg4: memref<8x3xf32, #tpu.memory_space<vmem>>) attributes {dimension_semantics = [#tpu.dimension_semantics<parallel>], iteration_bounds = array<i64: 1>, scalar_prefetch = 0 : i64, scratch_operands = 0 : i64, tpu.core_type = #tpu.core_type<tc>, window_params = [{transform_indices = @transform_0, window_bounds = array<i64: 8, 10>}, {pipeline_mode = #tpu.pipeline_mode<synchronous>, transform_indices = @transform_1, window_bounds = array<i64: 10, 3>}, {pipeline_mode = #tpu.pipeline_mode<synchronous>, transform_indices = @transform_2, window_bounds = array<i64: 1, 3>}, {transform_indices = @transform_3, window_bounds = array<i64: 8, 3>}]} {
    %c0 = arith.constant 0 : index
    %c0_0 = arith.constant 0 : index
    %0 = vector.load %arg1[%c0, %c0_0] : memref<8x10xf32, #tpu.memory_space<vmem>>, vector<8x10xf32>
    %c0_1 = arith.constant 0 : index
    %c0_2 = arith.constant 0 : index
    %1 = vector.load %arg2[%c0_1, %c0_2] : memref<10x3xf32, #tpu.memory_space<vmem>>, vector<10x3xf32>
    %c0_3 = arith.constant 0 : index
    %c0_4 = arith.constant 0 : index
    %2 = vector.load %arg3[%c0_3, %c0_4] : memref<1x3xf32, #tpu.memory_space<vmem>>, vector<1x3xf32>
    %cst = arith.constant dense<0.000000e+00> : vector<8x3xf32>
    %3 = tpu.matmul %0, %1, %cst {dimension_numbers = #tpu.dot_dimension_numbers<[1], [0], [0], [1], [0, 0, 1, 1], [], []>} : vector<8x10xf32>, vector<10x3xf32>, vector<8x3xf32> -> vector<8x3xf32>
    %4 = vector.broadcast %2 : vector<1x3xf32> to vector<8x3xf32>
    %5 = arith.addf %3, %4 : vector<8x3xf32>
    %c0_5 = arith.constant 0 : index
    %c0_6 = arith.constant 0 : index
    %6 = vector.load %arg4[%c0_5, %c0_6] : memref<8x3xf32, #tpu.memory_space<vmem>>, vector<8x3xf32>
    tpu.vector_store %arg4[%c0_5, %c0_6], %5 {strides = array<i32>} : memref<8x3xf32, #tpu.memory_space<vmem>>, vector<8x3xf32>,
    return
  }
  func.func @transform_0(%arg0: i32) -> (i32, i32) {
    %c0_i32 = arith.constant 0 : i32
    %c0_i32_0 = arith.constant 0 : i32
    return %arg0, %c0_i32 : i32, i32
  }
  func.func @transform_1(%arg0: i32) -> (i32, i32) {
    %c0_i32 = arith.constant 0 : i32
    %c0_i32_0 = arith.constant 0 : i32
    %c0_i32_1 = arith.constant 0 : i32
    return %c0_i32, %c0_i32_0 : i32, i32
  }
  func.func @transform_2(%arg0: i32) -> (i32, i32) {
    %c0_i32 = arith.constant 0 : i32
    %c0_i32_0 = arith.constant 0 : i32
    %c0_i32_1 = arith.constant 0 : i32
    return %c0_i32, %c0_i32_0 : i32, i32
  }
  func.func @transform_3(%arg0: i32) -> (i32, i32) {
    %c0_i32 = arith.constant 0 : i32
    %c0_i32_0 = arith.constant 0 : i32
    return %arg0, %c0_i32 : i32, i32
  }
}

</mosaic_0001>

<llo_original>
// kernel: simple_test_model_forward.1
$region0: #{simple_test_model_forward.1}
  #allocation0 [shape = 'u32[]', space=smem, size = 0x4, offset = 0x4, fixed_abs, tag = 'smem constant byte address 0x4 - core index']
  #allocation1 [shape = 'u32[144,128]{1,0:T(1,128)}', space=vmem, size = 0x12000, scoped, tag = 'internal scratch']
  %s0 = inlined_call_operand.vmem [shape: f32[8,10], index: 0, kind: input, shape index: {}]
  %s1 = inlined_call_operand.vmem [shape: f32[10,3], index: 1, kind: input, shape index: {}]
  %s2 = inlined_call_operand.vmem [shape: f32[1,3], index: 2, kind: input, shape index: {}]
  %s3 = inlined_call_operand.vmem [shape: f32[8,3], index: 3, kind: output, shape index: {}]
  %s4 = sld [smem:[#allocation0]]
  $region22: #{simple_test_model_forward.1} parent=0
    _
  %s6 = ssub.s32 1, %s4
  %s7 = scalar_select 0, %s6, %s4
  // Predicated region
  $region2: #{simple_test_model_forward.1} parent=0 // pred_check
    _
  $region3: #{simple_test_model_forward.1} parent=0 // pred_check_branch
    %9 = sbr.rel (0) target = $region5
  $region4: #{simple_test_model_forward.1} parent=0 // pred_region
    _
  $region5: #{simple_test_model_forward.1} parent=0 // pred_fallthru
    _
  // Predicated region
  $region6: #{simple_test_model_forward.1} parent=0 // pred_check
    _
  $region7: #{simple_test_model_forward.1} parent=0 // pred_check_branch
    %11 = sbr.rel (0) target = $region9
  $region8: #{simple_test_model_forward.1} parent=0 // pred_region
    _
  $region9: #{simple_test_model_forward.1} parent=0 // pred_fallthru
    _
  // Predicated region
  $region10: #{simple_test_model_forward.1} parent=0 // pred_check
    _
  $region11: #{simple_test_model_forward.1} parent=0 // pred_check_branch
    %13 = sbr.rel (0) target = $region13
  $region12: #{simple_test_model_forward.1} parent=0 // pred_region
    _
  $region13: #{simple_test_model_forward.1} parent=0 // pred_fallthru
    _
  %v14 = vld [vmem:[%s0] sm:$0xff]
  %v15 = vld [vmem:[%s1] sm:$0xff]
  %v16 = vld [vmem:[%s1 + $0x8] sm:$0x3]
  %v17 = vld [vmem:[%s2] sm:$0x1]
  %v19 = vlaneseq
  %v20 = vshrl.u32 %v19, 7
  %v21 = vsub.s32 0, %v20
  %v22 = vrot.slane %v17, %v21
  %vm24 = vcmask 80896
  %v26 = vsel %vm24, %v14, 0
  %vm28 = vcmask 1041408
  %v30 = vsel %vm28, %v16, 0
  %32 = vmatprep.subr.mxu0 0.0
  %33 = vmatpush1.msra.mxu0 0.0
  %34 = vmatprep.subr.mxu0 0.0
  %35 = vmatpush1.msra.mxu0 0.0
  %36 = vmatprep.subr.mxu0 0.0
  %37 = vmatpush1.msra.mxu0 0.0
  %38 = vmatprep.subr.mxu0 0.0
  %39 = vmatpush1.msra.mxu0 0.0
  %40 = vmatprep.subr.mxu0 0.0
  %41 = vmatpush1.msra.mxu0 0.0
  %42 = vmatprep.subr.mxu0 0.0
  %43 = vmatpush1.msra.mxu0 0.0
  %44 = vmatprep.subr.mxu0 0.0
  %45 = vmatpush1.msra.mxu0 0.0
  %46 = vmatprep.subr.mxu0 0.0
  %47 = vmatpush1.msra.mxu0 0.0
  %48 = vmatprep.subr.mxu0 0.0
  %49 = vmatpush1.msra.mxu0 0.0
  %50 = vmatprep.subr.mxu0 0.0
  %51 = vmatpush1.msra.mxu0 0.0
  %52 = vmatprep.subr.mxu0 0.0
  %53 = vmatpush1.msra.mxu0 0.0
  %54 = vmatprep.subr.mxu0 0.0
  %55 = vmatpush1.msra.mxu0 0.0
  %56 = vmatprep.subr.mxu0 0.0
  %57 = vmatpush1.msra.mxu0 0.0
  %58 = vmatprep.subr.mxu0 0.0
  %59 = vmatpush1.msra.mxu0 0.0
  %60 = vmatprep.subr.mxu0 0.0
  %61 = vmatpush1.msra.mxu0 %v30
  %62 = vmatprep.subr.mxu0 0.0
  %63 = vmatpush1.msra.mxu0 %v15
  %64 = vmatprep.subr.mxu0 0.0
  %65 = vmatpush2.msra.mxu0 0.0
  %66 = vmatprep.subr.mxu0 0.0
  %67 = vmatpush2.msra.mxu0 0.0
  %68 = vmatprep.subr.mxu0 0.0
  %69 = vmatpush2.msra.mxu0 0.0
  %70 = vmatprep.subr.mxu0 0.0
  %71 = vmatpush2.msra.mxu0 0.0
  %72 = vmatprep.subr.mxu0 0.0
  %73 = vmatpush2.msra.mxu0 0.0
  %74 = vmatprep.subr.mxu0 0.0
  %75 = vmatpush2.msra.mxu0 0.0
  %76 = vmatprep.subr.mxu0 0.0
  %77 = vmatpush2.msra.mxu0 0.0
  %78 = vmatprep.subr.mxu0 0.0
  %79 = vmatpush2.msra.mxu0 0.0
  %80 = vmatprep.subr.mxu0 0.0
  %81 = vmatpush2.msra.mxu0 0.0
  %82 = vmatprep.subr.mxu0 0.0
  %83 = vmatpush2.msra.mxu0 0.0
  %84 = vmatprep.subr.mxu0 0.0
  %85 = vmatpush2.msra.mxu0 0.0
  %86 = vmatprep.subr.mxu0 0.0
  %87 = vmatpush2.msra.mxu0 0.0
  %88 = vmatprep.subr.mxu0 0.0
  %89 = vmatpush2.msra.mxu0 0.0
  %90 = vmatprep.subr.mxu0 0.0
  %91 = vmatpush2.msra.mxu0 0.0
  %92 = vmatprep.subr.mxu0 0.0
  %93 = vmatpush2.msra.mxu0 0.0
  %94 = vmatprep.subr.mxu0 0.0
  %95 = vmatpush2.msra.mxu0 0.0
  %96 = vmatprep.mubr.f32.mxu0 0.0
  %97 = vmatmul.mubr.f32.gmra.mxu0 %v26
  %v98 = vpop.f32.mrf.mxu0
  %v99 = vadd.f32 %v22, %v98
  %v100 = vpop.f32.mrf.mxu0
  %101 = vdwg.mxu0
  %vm102 = vcmask 23552
  %103 = vst.msk [vmem:[%s3] sm:$0xff] %vm102, %v99
  // Predicated region
  $region14: #{simple_test_model_forward.1} parent=0 // pred_check
    _
  $region15: #{simple_test_model_forward.1} parent=0 // pred_check_branch
    %105 = sbr.rel (0) target = $region17
  $region16: #{simple_test_model_forward.1} parent=0 // pred_region
    _
  $region17: #{simple_test_model_forward.1} parent=0 // pred_fallthru
    _
  // Predicated region
  $region18: #{simple_test_model_forward.1} parent=0 // pred_check
    _
  $region19: #{simple_test_model_forward.1} parent=0 // pred_check_branch
    %107 = sbr.rel (0) target = $region21
  $region20: #{simple_test_model_forward.1} parent=0 // pred_region
    _
  $region21: #{simple_test_model_forward.1} parent=0 // pred_fallthru
    _

</llo_original>
